<compile_context>
chip_gen: v7x
topology: tpu7x:2x2x1
jax: 0.10.0
libtpu: 0.0.40
codegen_flags: <defaults>
</compile_context>

<pallas_src>
import jax
import jax.numpy as jnp
from jax.experimental import pallas as pl
from jax.experimental.pallas import tpu as pltpu


def selection_wrapper_kernel(x_ref, gate_logits_ref, o_ref):
    # x_ref:           (TB, E, F) block of the ensemble (TB batch rows per grid step)
    # gate_logits_ref: (1, F)     selector logits (shared across batch, block resident)
    # o_ref:           (TB, F)    merged + selected output
    x = x_ref[...].astype(jnp.float32)                 # upcast if bf16 input is used
    e = x.shape[1]

    # Ensemble-axis statistics (axis=1 == sublane axis of each (E, F) slab).
    mean = jnp.mean(x, axis=1)                         # (TB, F)
    centered = x - mean[:, None, :]                    # (TB, E, F)
    var = jnp.sum(centered * centered, axis=1) * (1.0 / jnp.float32(e - 1))  # unbiased, (TB, F)

    # Fused merge-after-normalize: mean(x / std) == mean(x) * rsqrt(var).
    inv_std = jax.lax.rsqrt(var)                       # EUP op, own VLIW slot

    # Selector: per-feature sigmoid gate; (1, F) broadcasts over the TB rows.
    gate = jax.nn.sigmoid(gate_logits_ref[...])

    o_ref[...] = (mean * inv_std * gate).astype(o_ref.dtype)


def _pick_block_rows(B, E, F, itemsize):
    """Choose TB: ~4 MiB input blocks, multiple of 8 (sublane-dense output), capped by B."""
    target_bytes = 4 * 1024 * 1024
    tb = max(1, target_bytes // max(1, E * F * itemsize))
    if B < 8:
        return B                      # full-extent block (satisfies the (8,128) rule)
    tb = min(tb, B)
    tb = max(8, (tb // 8) * 8)        # sublane-dense output tiles
    return tb


def selection_wrapper_forward(ensemble, gate_logits, *, block_rows=None):
    """ensemble: (B, E, F) f32/bf16, gate_logits: (1, F) f32 -> (B, F) f32."""
    B, E, F = ensemble.shape
    itemsize = jnp.dtype(ensemble.dtype).itemsize
    TB = block_rows if block_rows is not None else _pick_block_rows(B, E, F, itemsize)

    # Pad batch to a multiple of TB (edge-replicate so discarded rows stay finite).
    Bp = ((B + TB - 1) // TB) * TB
    if Bp != B:
        pad = Bp - B
        ensemble_p = jnp.concatenate(
            [ensemble, jnp.broadcast_to(ensemble[-1:], (pad, E, F))], axis=0
        )
    else:
        ensemble_p = ensemble

    out = pl.pallas_call(
        selection_wrapper_kernel,
        out_shape=jax.ShapeDtypeStruct((Bp, F), jnp.float32),
        grid=(Bp // TB,),
        in_specs=[
            pl.BlockSpec((TB, E, F), lambda b: (b, 0, 0)),
            pl.BlockSpec((1, F), lambda b: (0, 0)),
        ],
        out_specs=pl.BlockSpec((TB, F), lambda b: (b, 0)),
        compiler_params=pltpu.CompilerParams(
            dimension_semantics=("parallel",),   # lets the grid shard across v7x's 2 TCs
        ),
    )(ensemble_p, gate_logits)
    return out[:B]


def reference_forward(ensemble, gate_logits):
    # Pure-JAX reference mirroring the PyTorch semantics.
    std = jnp.std(ensemble.astype(jnp.float32), axis=-2, ddof=1, keepdims=True)  # unbiased=True
    x_norm = ensemble.astype(jnp.float32) / std
    merged = jnp.mean(x_norm, axis=-2)                                           # keepdim=False
    gate = jax.nn.sigmoid(gate_logits)[0]
    return merged * gate


if __name__ == "__main__":
    key = jax.random.PRNGKey(0)
    k_x, k_g = jax.random.split(key)

    B, E, F = 16, 8, 128  # batch, ensemble members (dim=-2), features
    ensemble = jax.random.normal(k_x, (B, E, F), dtype=jnp.float32)
    # Deterministic selector parameter (logits of the per-feature gate).
    gate_logits = (0.1 * jax.random.normal(k_g, (1, F), dtype=jnp.float32)).astype(jnp.float32)

    out = selection_wrapper_forward(ensemble, gate_logits)
    out = jax.block_until_ready(out)

    ref = reference_forward(ensemble, gate_logits)
    assert out.shape == (B, F)
    assert jnp.allclose(out, ref, atol=1e-5, rtol=1e-5), "mismatch vs reference"

    print("KERNEL_OK")
</pallas_src>

<mosaic_0001>
module attributes {stable_mosaic.version = 11 : i64} {
  func.func @selection_wrapper_kernel(%arg0: i32, %arg1: memref<16x8x128xf32, #tpu.memory_space<vmem>>, %arg2: memref<1x128xf32, #tpu.memory_space<vmem>>, %arg3: memref<16x128xf32, #tpu.memory_space<vmem>>) attributes {dimension_semantics = [#tpu.dimension_semantics<parallel>], iteration_bounds = array<i64: 1>, scalar_prefetch = 0 : i64, scratch_operands = 0 : i64, tpu.core_type = #tpu.core_type<tc>, window_params = [{transform_indices = @transform_0, window_bounds = array<i64: 16, 8, 128>}, {pipeline_mode = #tpu.pipeline_mode<synchronous>, transform_indices = @transform_1, window_bounds = array<i64: 1, 128>}, {transform_indices = @transform_2, window_bounds = array<i64: 16, 128>}]} {
    %c0 = arith.constant 0 : index
    %c0_0 = arith.constant 0 : index
    %c0_1 = arith.constant 0 : index
    %0 = vector.load %arg1[%c0, %c0_0, %c0_1] : memref<16x8x128xf32, #tpu.memory_space<vmem>>, vector<16x8x128xf32>
    %cst = arith.constant dense<0.000000e+00> : vector<16x128xf32>
    %1 = vector.multi_reduction <add>, %0, %cst [1] : vector<16x8x128xf32> to vector<16x128xf32>
    %cst_2 = arith.constant 8.000000e+00 : f32
    %2 = vector.broadcast %cst_2 : f32 to vector<16x128xf32>
    %3 = arith.divf %1, %2 : vector<16x128xf32>
    %4 = vector.shape_cast %3 : vector<16x128xf32> to vector<16x1x128xf32>
    %5 = vector.broadcast %4 : vector<16x1x128xf32> to vector<16x8x128xf32>
    %6 = arith.subf %0, %5 : vector<16x8x128xf32>
    %7 = arith.mulf %6, %6 : vector<16x8x128xf32>
    %cst_3 = arith.constant dense<0.000000e+00> : vector<16x128xf32>
    %8 = vector.multi_reduction <add>, %7, %cst_3 [1] : vector<16x8x128xf32> to vector<16x128xf32>
    %cst_4 = arith.constant 1.000000e+00 : f32
    %cst_5 = arith.constant 7.000000e+00 : f32
    %9 = arith.divf %cst_4, %cst_5 : f32
    %10 = vector.broadcast %9 : f32 to vector<16x128xf32>
    %11 = arith.mulf %8, %10 : vector<16x128xf32>
    %12 = math.rsqrt %11 : vector<16x128xf32>
    %c0_6 = arith.constant 0 : index
    %c0_7 = arith.constant 0 : index
    %13 = vector.load %arg2[%c0_6, %c0_7] : memref<1x128xf32, #tpu.memory_space<vmem>>, vector<1x128xf32>
    %14 = arith.negf %13 : vector<1x128xf32>
    %15 = math.exp %14 : vector<1x128xf32>
    %cst_8 = arith.constant 1.000000e+00 : f32
    %16 = vector.broadcast %cst_8 : f32 to vector<1x128xf32>
    %17 = arith.addf %16, %15 : vector<1x128xf32>
    %18 = arith.divf %16, %17 : vector<1x128xf32>
    %19 = arith.mulf %3, %12 : vector<16x128xf32>
    %20 = vector.broadcast %18 : vector<1x128xf32> to vector<16x128xf32>
    %21 = arith.mulf %19, %20 : vector<16x128xf32>
    %c0_9 = arith.constant 0 : index
    %c0_10 = arith.constant 0 : index
    %22 = vector.load %arg3[%c0_9, %c0_10] : memref<16x128xf32, #tpu.memory_space<vmem>>, vector<16x128xf32>
    tpu.vector_store %arg3[%c0_9, %c0_10], %21 {strides = array<i32>} : memref<16x128xf32, #tpu.memory_space<vmem>>, vector<16x128xf32>,
    return
  }
  func.func @transform_0(%arg0: i32) -> (i32, i32, i32) {
    %c0_i32 = arith.constant 0 : i32
    %c0_i32_0 = arith.constant 0 : i32
    %c0_i32_1 = arith.constant 0 : i32
    return %arg0, %c0_i32, %c0_i32_0 : i32, i32, i32
  }
  func.func @transform_1(%arg0: i32) -> (i32, i32) {
    %c0_i32 = arith.constant 0 : i32
    %c0_i32_0 = arith.constant 0 : i32
    %c0_i32_1 = arith.constant 0 : i32
    return %c0_i32, %c0_i32_0 : i32, i32
  }
  func.func @transform_2(%arg0: i32) -> (i32, i32) {
    %c0_i32 = arith.constant 0 : i32
    %c0_i32_0 = arith.constant 0 : i32
    return %arg0, %c0_i32 : i32, i32
  }
}

</mosaic_0001>

<llo_original>
// kernel: tpu_custom_call.1
$region0: #{tpu_custom_call.1}
  #allocation0 [shape = 'u32[]', space=smem, size = 0x4, offset = 0x4, fixed_abs, tag = 'smem constant byte address 0x4 - core index']
  #allocation1 [shape = 'u32[144,128]{1,0:T(1,128)}', space=vmem, size = 0x12000, scoped, tag = 'internal scratch']
  %s0 = inlined_call_operand.hbm [shape: f32[16,8,128], index: 0, kind: input, shape index: {}]
  %s1 = inlined_call_operand.vmem [shape: f32[1,128], index: 1, kind: input, shape index: {}]
  %s2 = inlined_call_operand.hbm [shape: f32[16,128], index: 2, kind: output, shape index: {}]
  %s3 = sld [smem:[#allocation0]]
  $region22: #{tpu_custom_call.1} parent=0
    _
  %s5 = ssub.s32 1, %s3
  %s6 = scalar_select 0, %s5, %s3
  $region1: #{tpu_custom_call.1} parent=0
    #allocation2 [shape = 'u8[65536]{0}', space=vmem, size = 0x10000, scoped, tag = 'input window, operand 0, single buffered']
    #allocation3 [shape = 's32[1]{0}', space=sflag, size = 0x4, scoped, tag = 'scoped memory for tpu_custom_call.1']
    #allocation4 [shape = 's32[1]{0}', space=sflag, size = 0x4, scoped, tag = 'scoped memory for tpu_custom_call.1']
    #allocation5 [shape = 'u8[8192]{0}', space=vmem, size = 0x2000, scoped, tag = 'output window, operand 0, single buffered']
    %7 = vsyncpa [#allocation3], 0
    %8 = vsyncpa [#allocation4], 0
    // Predicated region
    $region2: #{tpu_custom_call.1} parent=1 // pred_check
      _
    $region3: #{tpu_custom_call.1} parent=1 // pred_check_branch
      %10 = sbr.rel (0) target = $region5
    $region4: #{tpu_custom_call.1} parent=1 // pred_region
      %s12 = ssub.s32 2048, 2048
      %13 = vsyncadd [#allocation3], %s12
      %s14 = sshll.u32 [#allocation2], 4
      %s15 = int_to_ptr.vmem [resolvable:$true] %s14
      %20 = dma.hbm_to_vmem [thread:$0]  %s0, 2048, %s15, [#allocation3], 128, 128, 8
    $region5: #{tpu_custom_call.1} parent=1 // pred_fallthru
      _
    // Predicated region
    $region6: #{tpu_custom_call.1} parent=1 // pred_check
      _
    $region7: #{tpu_custom_call.1} parent=1 // pred_check_branch
      %22 = sbr.rel (0) target = $region9
    $region8: #{tpu_custom_call.1} parent=1 // pred_region
      _
    $region9: #{tpu_custom_call.1} parent=1 // pred_fallthru
      _
    // Predicated region
    $region10: #{tpu_custom_call.1} parent=1 // pred_check
      _
    $region11: #{tpu_custom_call.1} parent=1 // pred_check_branch
      %24 = sbr.rel (0) target = $region13
    $region12: #{tpu_custom_call.1} parent=1 // pred_region
      %25 = dma.done [#allocation3], 2048
    $region13: #{tpu_custom_call.1} parent=1 // pred_fallthru
      _
    %v26 = vld [vmem:[#allocation2] sm:$0xff]
    %v27 = vld [vmem:[#allocation2 + $0x8] sm:$0xff]
    %v28 = vld [vmem:[#allocation2 + $0x10] sm:$0xff]
    %v29 = vld [vmem:[#allocation2 + $0x18] sm:$0xff]
    %v30 = vld [vmem:[#allocation2 + $0x20] sm:$0xff]
    %v31 = vld [vmem:[#allocation2 + $0x28] sm:$0xff]
    %v32 = vld [vmem:[#allocation2 + $0x30] sm:$0xff]
    %v33 = vld [vmem:[#allocation2 + $0x38] sm:$0xff]
    %v34 = vld [vmem:[#allocation2 + $0x40] sm:$0xff]
    %v35 = vld [vmem:[#allocation2 + $0x48] sm:$0xff]
    %v36 = vld [vmem:[#allocation2 + $0x50] sm:$0xff]
    %v37 = vld [vmem:[#allocation2 + $0x58] sm:$0xff]
    %v38 = vld [vmem:[#allocation2 + $0x60] sm:$0xff]
    %v39 = vld [vmem:[#allocation2 + $0x68] sm:$0xff]
    %v40 = vld [vmem:[#allocation2 + $0x70] sm:$0xff]
    %v41 = vld [vmem:[#allocation2 + $0x78] sm:$0xff]
    %v42 = vrot.slane %v26, 4
    %v43 = vadd.f32 %v26, %v42
    %v44 = vrot.slane %v43, 2
    %v45 = vadd.f32 %v43, %v44
    %v46 = vrot.slane %v45, 1
    %v47 = vadd.f32 %v45, %v46
    %v48 = vrot.slane %v27, 4
    %v49 = vadd.f32 %v27, %v48
    %v50 = vrot.slane %v49, 2
    %v51 = vadd.f32 %v49, %v50
    %v52 = vrot.slane %v51, 1
    %v53 = vadd.f32 %v51, %v52
    %v54 = vrot.slane %v28, 4
    %v55 = vadd.f32 %v28, %v54
    %v56 = vrot.slane %v55, 2
    %v57 = vadd.f32 %v55, %v56
    %v58 = vrot.slane %v57, 1
    %v59 = vadd.f32 %v57, %v58
    %v60 = vrot.slane %v29, 4
    %v61 = vadd.f32 %v29, %v60
    %v62 = vrot.slane %v61, 2
    %v63 = vadd.f32 %v61, %v62
    %v64 = vrot.slane %v63, 1
    %v65 = vadd.f32 %v63, %v64
    %v66 = vrot.slane %v30, 4
    %v67 = vadd.f32 %v30, %v66
    %v68 = vrot.slane %v67, 2
    %v69 = vadd.f32 %v67, %v68
    %v70 = vrot.slane %v69, 1
    %v71 = vadd.f32 %v69, %v70
    %v72 = vrot.slane %v31, 4
    %v73 = vadd.f32 %v31, %v72
    %v74 = vrot.slane %v73, 2
    %v75 = vadd.f32 %v73, %v74
    %v76 = vrot.slane %v75, 1
    %v77 = vadd.f32 %v75, %v76
    %v78 = vrot.slane %v32, 4
    %v79 = vadd.f32 %v32, %v78
    %v80 = vrot.slane %v79, 2
    %v81 = vadd.f32 %v79, %v80
    %v82 = vrot.slane %v81, 1
    %v83 = vadd.f32 %v81, %v82
    %v84 = vrot.slane %v33, 4
    %v85 = vadd.f32 %v33, %v84
    %v86 = vrot.slane %v85, 2
    %v87 = vadd.f32 %v85, %v86
    %v88 = vrot.slane %v87, 1
    %v89 = vadd.f32 %v87, %v88
    %v90 = vrot.slane %v34, 4
    %v91 = vadd.f32 %v34, %v90
    %v92 = vrot.slane %v91, 2
    %v93 = vadd.f32 %v91, %v92
    %v94 = vrot.slane %v93, 1
    %v95 = vadd.f32 %v93, %v94
    %v96 = vrot.slane %v35, 4
    %v97 = vadd.f32 %v35, %v96
    %v98 = vrot.slane %v97, 2
    %v99 = vadd.f32 %v97, %v98
    %v100 = vrot.slane %v99, 1
    %v101 = vadd.f32 %v99, %v100
    %v102 = vrot.slane %v36, 4
    %v103 = vadd.f32 %v36, %v102
    %v104 = vrot.slane %v103, 2
    %v105 = vadd.f32 %v103, %v104
    %v106 = vrot.slane %v105, 1
    %v107 = vadd.f32 %v105, %v106
    %v108 = vrot.slane %v37, 4
    %v109 = vadd.f32 %v37, %v108
    %v110 = vrot.slane %v109, 2
    %v111 = vadd.f32 %v109, %v110
    %v112 = vrot.slane %v111, 1
    %v113 = vadd.f32 %v111, %v112
    %v114 = vrot.slane %v38, 4
    %v115 = vadd.f32 %v38, %v114
    %v116 = vrot.slane %v115, 2
    %v117 = vadd.f32 %v115, %v116
    %v118 = vrot.slane %v117, 1
    %v119 = vadd.f32 %v117, %v118
    %v120 = vrot.slane %v39, 4
    %v121 = vadd.f32 %v39, %v120
    %v122 = vrot.slane %v121, 2
    %v123 = vadd.f32 %v121, %v122
    %v124 = vrot.slane %v123, 1
    %v125 = vadd.f32 %v123, %v124
    %v126 = vrot.slane %v40, 4
    %v127 = vadd.f32 %v40, %v126
    %v128 = vrot.slane %v127, 2
    %v129 = vadd.f32 %v127, %v128
    %v130 = vrot.slane %v129, 1
    %v131 = vadd.f32 %v129, %v130
    %v132 = vrot.slane %v41, 4
    %v133 = vadd.f32 %v41, %v132
    %v134 = vrot.slane %v133, 2
    %v135 = vadd.f32 %v133, %v134
    %v136 = vrot.slane %v135, 1
    %v137 = vadd.f32 %v135, %v136
    %v138 = vrcp.pop 8.0
    %v139 = vmul.f32 %v47, %v138
    %v140 = vmul.f32 %v53, %v138
    %v141 = vmul.f32 %v59, %v138
    %v142 = vmul.f32 %v65, %v138
    %v143 = vmul.f32 %v71, %v138
    %v144 = vmul.f32 %v77, %v138
    %v145 = vmul.f32 %v83, %v138
    %v146 = vmul.f32 %v89, %v138
    %v147 = vmul.f32 %v95, %v138
    %v148 = vmul.f32 %v101, %v138
    %v149 = vmul.f32 %v107, %v138
    %v150 = vmul.f32 %v113, %v138
    %v151 = vmul.f32 %v119, %v138
    %v152 = vmul.f32 %v125, %v138
    %v153 = vmul.f32 %v131, %v138
    %v154 = vmul.f32 %v137, %v138
    %v155 = vsub.f32 %v26, %v139
    %v156 = vsub.f32 %v27, %v140
    %v157 = vsub.f32 %v28, %v141
    %v158 = vsub.f32 %v29, %v142
    %v159 = vsub.f32 %v30, %v143
    %v160 = vsub.f32 %v31, %v144
    %v161 = vsub.f32 %v32, %v145
    %v162 = vsub.f32 %v33, %v146
    %v163 = vsub.f32 %v34, %v147
    %v164 = vsub.f32 %v35, %v148
    %v165 = vsub.f32 %v36, %v149
    %v166 = vsub.f32 %v37, %v150
    %v167 = vsub.f32 %v38, %v151
    %v168 = vsub.f32 %v39, %v152
    %v169 = vsub.f32 %v40, %v153
    %v170 = vsub.f32 %v41, %v154
    %v171 = vmul.f32 %v155, %v155
    %v172 = vmul.f32 %v156, %v156
    %v173 = vmul.f32 %v157, %v157
    %v174 = vmul.f32 %v158, %v158
    %v175 = vmul.f32 %v159, %v159
    %v176 = vmul.f32 %v160, %v160
    %v177 = vmul.f32 %v161, %v161
    %v178 = vmul.f32 %v162, %v162
    %v179 = vmul.f32 %v163, %v163
    %v180 = vmul.f32 %v164, %v164
    %v181 = vmul.f32 %v165, %v165
    %v182 = vmul.f32 %v166, %v166
    %v183 = vmul.f32 %v167, %v167
    %v184 = vmul.f32 %v168, %v168
    %v185 = vmul.f32 %v169, %v169
    %v186 = vmul.f32 %v170, %v170
    %v187 = vrot.slane %v171, 4
    %v188 = vadd.f32 %v171, %v187
    %v189 = vrot.slane %v188, 2
    %v190 = vadd.f32 %v188, %v189
    %v191 = vrot.slane %v190, 1
    %v192 = vadd.f32 %v190, %v191
    %v193 = vrot.slane %v172, 4
    %v194 = vadd.f32 %v172, %v193
    %v195 = vrot.slane %v194, 2
    %v196 = vadd.f32 %v194, %v195
    %v197 = vrot.slane %v196, 1
    %v198 = vadd.f32 %v196, %v197
    %v199 = vrot.slane %v173, 4
    %v200 = vadd.f32 %v173, %v199
    %v201 = vrot.slane %v200, 2
    %v202 = vadd.f32 %v200, %v201
    %v203 = vrot.slane %v202, 1
    %v204 = vadd.f32 %v202, %v203
    %v205 = vrot.slane %v174, 4
    %v206 = vadd.f32 %v174, %v205
    %v207 = vrot.slane %v206, 2
    %v208 = vadd.f32 %v206, %v207
    %v209 = vrot.slane %v208, 1
    %v210 = vadd.f32 %v208, %v209
    %v211 = vrot.slane %v175, 4
    %v212 = vadd.f32 %v175, %v211
    %v213 = vrot.slane %v212, 2
    %v214 = vadd.f32 %v212, %v213
    %v215 = vrot.slane %v214, 1
    %v216 = vadd.f32 %v214, %v215
    %v217 = vrot.slane %v176, 4
    %v218 = vadd.f32 %v176, %v217
    %v219 = vrot.slane %v218, 2
    %v220 = vadd.f32 %v218, %v219
    %v221 = vrot.slane %v220, 1
    %v222 = vadd.f32 %v220, %v221
    %v223 = vrot.slane %v177, 4
    %v224 = vadd.f32 %v177, %v223
    %v225 = vrot.slane %v224, 2
    %v226 = vadd.f32 %v224, %v225
    %v227 = vrot.slane %v226, 1
    %v228 = vadd.f32 %v226, %v227
    %v229 = vrot.slane %v178, 4
    %v230 = vadd.f32 %v178, %v229
    %v231 = vrot.slane %v230, 2
    %v232 = vadd.f32 %v230, %v231
    %v233 = vrot.slane %v232, 1
    %v234 = vadd.f32 %v232, %v233
    %v235 = vrot.slane %v179, 4
    %v236 = vadd.f32 %v179, %v235
    %v237 = vrot.slane %v236, 2
    %v238 = vadd.f32 %v236, %v237
    %v239 = vrot.slane %v238, 1
    %v240 = vadd.f32 %v238, %v239
    %v241 = vrot.slane %v180, 4
    %v242 = vadd.f32 %v180, %v241
    %v243 = vrot.slane %v242, 2
    %v244 = vadd.f32 %v242, %v243
    %v245 = vrot.slane %v244, 1
    %v246 = vadd.f32 %v244, %v245
    %v247 = vrot.slane %v181, 4
    %v248 = vadd.f32 %v181, %v247
    %v249 = vrot.slane %v248, 2
    %v250 = vadd.f32 %v248, %v249
    %v251 = vrot.slane %v250, 1
    %v252 = vadd.f32 %v250, %v251
    %v253 = vrot.slane %v182, 4
    %v254 = vadd.f32 %v182, %v253
    %v255 = vrot.slane %v254, 2
    %v256 = vadd.f32 %v254, %v255
    %v257 = vrot.slane %v256, 1
    %v258 = vadd.f32 %v256, %v257
    %v259 = vrot.slane %v183, 4
    %v260 = vadd.f32 %v183, %v259
    %v261 = vrot.slane %v260, 2
    %v262 = vadd.f32 %v260, %v261
    %v263 = vrot.slane %v262, 1
    %v264 = vadd.f32 %v262, %v263
    %v265 = vrot.slane %v184, 4
    %v266 = vadd.f32 %v184, %v265
    %v267 = vrot.slane %v266, 2
    %v268 = vadd.f32 %v266, %v267
    %v269 = vrot.slane %v268, 1
    %v270 = vadd.f32 %v268, %v269
    %v271 = vrot.slane %v185, 4
    %v272 = vadd.f32 %v185, %v271
    %v273 = vrot.slane %v272, 2
    %v274 = vadd.f32 %v272, %v273
    %v275 = vrot.slane %v274, 1
    %v276 = vadd.f32 %v274, %v275
    %v277 = vrot.slane %v186, 4
    %v278 = vadd.f32 %v186, %v277
    %v279 = vrot.slane %v278, 2
    %v280 = vadd.f32 %v278, %v279
    %v281 = vrot.slane %v280, 1
    %v282 = vadd.f32 %v280, %v281
    %v283 = vmul.f32 %v192, 0.14285715
    %v284 = vmul.f32 %v198, 0.14285715
    %v285 = vmul.f32 %v204, 0.14285715
    %v286 = vmul.f32 %v210, 0.14285715
    %v287 = vmul.f32 %v216, 0.14285715
    %v288 = vmul.f32 %v222, 0.14285715
    %v289 = vmul.f32 %v228, 0.14285715
    %v290 = vmul.f32 %v234, 0.14285715
    %v291 = vmul.f32 %v240, 0.14285715
    %v292 = vmul.f32 %v246, 0.14285715
    %v293 = vmul.f32 %v252, 0.14285715
    %v294 = vmul.f32 %v258, 0.14285715
    %v295 = vmul.f32 %v264, 0.14285715
    %v296 = vmul.f32 %v270, 0.14285715
    %v297 = vmul.f32 %v276, 0.14285715
    %v298 = vmul.f32 %v282, 0.14285715
    %v299 = vrsqrt.pop %v283
    %v300 = vrsqrt.pop %v284
    %v301 = vrsqrt.pop %v285
    %v302 = vrsqrt.pop %v286
    %v303 = vrsqrt.pop %v287
    %v304 = vrsqrt.pop %v288
    %v305 = vrsqrt.pop %v289
    %v306 = vrsqrt.pop %v290
    %v307 = vrsqrt.pop %v291
    %v308 = vrsqrt.pop %v292
    %v309 = vrsqrt.pop %v293
    %v310 = vrsqrt.pop %v294
    %v311 = vrsqrt.pop %v295
    %v312 = vrsqrt.pop %v296
    %v313 = vrsqrt.pop %v297
    %v314 = vrsqrt.pop %v298
    %v315 = vld [vmem:[%s1] sm:$0x1]
    %v316 = vxor.u32 %v315, 2147483648
    %v317 = vmul.f32 %v316, 1.442695
    %v318 = vpow.pop %v317
    %v319 = vadd.f32 %v318, 1.0
    %v320 = vrcp.pop %v319
    %v321 = vmul.f32 1.0, %v320
    %v322 = vmul.f32 %v139, %v299
    %v323 = vmul.f32 %v140, %v300
    %v324 = vmul.f32 %v141, %v301
    %v325 = vmul.f32 %v142, %v302
    %v326 = vmul.f32 %v143, %v303
    %v327 = vmul.f32 %v144, %v304
    %v328 = vmul.f32 %v145, %v305
    %v329 = vmul.f32 %v146, %v306
    %v330 = vmul.f32 %v147, %v307
    %v331 = vmul.f32 %v148, %v308
    %v332 = vmul.f32 %v149, %v309
    %v333 = vmul.f32 %v150, %v310
    %v334 = vmul.f32 %v151, %v311
    %v335 = vmul.f32 %v152, %v312
    %v336 = vmul.f32 %v153, %v313
    %v337 = vmul.f32 %v154, %v314
    %v339 = vlaneseq
    %v340 = vshrl.u32 %v339, 7
    %v341 = vsub.s32 0, %v340
    %v342 = vrot.slane %v321, %v341
    %v344 = vmul.f32 %v322, %v342
    %v345 = vmul.f32 %v323, %v342
    %v346 = vmul.f32 %v324, %v342
    %v347 = vmul.f32 %v325, %v342
    %v348 = vmul.f32 %v326, %v342
    %v349 = vmul.f32 %v327, %v342
    %v350 = vmul.f32 %v328, %v342
    %v351 = vmul.f32 %v329, %v342
    %v352 = vmul.f32 %v330, %v342
    %v353 = vmul.f32 %v331, %v342
    %v354 = vmul.f32 %v332, %v342
    %v355 = vmul.f32 %v333, %v342
    %v356 = vmul.f32 %v334, %v342
    %v357 = vmul.f32 %v335, %v342
    %v358 = vmul.f32 %v336, %v342
    %v359 = vmul.f32 %v337, %v342
    %v376 = vrot.slane %v345, 7
    %vm377 = vcmask 1041409
    %v378 = vsel %vm377, %v376, %v344
    %v379 = vrot.slane %v346, 6
    %vm380 = vcmask 1042434
    %v381 = vsel %vm380, %v379, %v378
    %v382 = vrot.slane %v347, 5
    %vm383 = vcmask 1043459
    %v384 = vsel %vm383, %v382, %v381
    %v385 = vrot.slane %v348, 4
    %vm386 = vcmask 1044484
    %v387 = vsel %vm386, %v385, %v384
    %v388 = vrot.slane %v349, 3
    %vm389 = vcmask 1045509
    %v390 = vsel %vm389, %v388, %v387
    %v391 = vrot.slane %v350, 2
    %vm392 = vcmask 1046534
    %v393 = vsel %vm392, %v391, %v390
    %v394 = vrot.slane %v351, 1
    %vm395 = vcmask 1047559
    %v396 = vsel %vm395, %v394, %v393
    %v397 = vrot.slane %v353, 7
    %v398 = vsel %vm377, %v397, %v352
    %v399 = vrot.slane %v354, 6
    %v400 = vsel %vm380, %v399, %v398
    %v401 = vrot.slane %v355, 5
    %v402 = vsel %vm383, %v401, %v400
    %v403 = vrot.slane %v356, 4
    %v404 = vsel %vm386, %v403, %v402
    %v405 = vrot.slane %v357, 3
    %v406 = vsel %vm389, %v405, %v404
    %v407 = vrot.slane %v358, 2
    %v408 = vsel %vm392, %v407, %v406
    %v409 = vrot.slane %v359, 1
    %v410 = vsel %vm395, %v409, %v408
    %413 = vst [vmem:[#allocation5] sm:$0xff] %v396
    %414 = vst [vmem:[#allocation5 + $0x8] sm:$0xff] %v410
    // Predicated region
    $region14: #{tpu_custom_call.1} parent=1 // pred_check
      _
    $region15: #{tpu_custom_call.1} parent=1 // pred_check_branch
      %416 = sbr.rel (0) target = $region17
    $region16: #{tpu_custom_call.1} parent=1 // pred_region
      %s418 = ssub.s32 256, 256
      %419 = vsyncadd [#allocation4], %s418
      %s420 = sshll.u32 [#allocation5], 4
      %s421 = int_to_ptr.vmem [resolvable:$true] %s420
      %426 = dma.vmem_to_hbm [thread:$0]  %s421, 256, %s2, [#allocation4], 128, 128, 8
    $region17: #{tpu_custom_call.1} parent=1 // pred_fallthru
      _
    // Predicated region
    $region18: #{tpu_custom_call.1} parent=1 // pred_check
      _
    $region19: #{tpu_custom_call.1} parent=1 // pred_check_branch
      %428 = sbr.rel (0) target = $region21
    $region20: #{tpu_custom_call.1} parent=1 // pred_region
      %429 = dma.done [#allocation4], 256
    $region21: #{tpu_custom_call.1} parent=1 // pred_fallthru
      _
    %430 = vsyncpa [#allocation3], 1
    %431 = vsyncpa [#allocation4], 1

</llo_original>
